<compile_context>
chip_gen: v7x
topology: tpu7x:2x2x1
jax: 0.10.0
libtpu: 0.0.40
codegen_flags: <defaults>
</compile_context>

<pallas_src>
import jax
import jax.numpy as jnp
from jax import lax
from jax.experimental import pallas as pl
from jax.experimental.pallas import tpu as pltpu

EPS = 1e-8
# TODO(synk): BASE_* are synthetic stand-ins for the distilbert-base-uncased /
# layer-5 / en baseline row used by rescale_with_baseline=True (file on disk in
# the original package); absolute scores therefore differ from bert_score.
BASE_P, BASE_R, BASE_F = 0.80, 0.80, 0.80


def _round_up(x, m):
    return (x + m - 1) // m * m


def _vmem_budget_bytes():
    """Usable VMEM budget (bytes); conservative fallback fits v7x (64 MiB)."""
    try:
        info = pltpu.get_tpu_info()
        phys = getattr(info, "vmem_capacity_bytes", None)
        if phys:
            return int(phys * 0.75)
    except Exception:
        pass
    return 48 << 20


def _pick_block_b(B, Tc, Tr, D, budget):
    """Largest per-step batch that fits the VMEM budget with ~20% headroom."""
    def need(bb):
        return (2 * bb * (Tc + Tr) * D * 2      # double-buffered bf16 input blocks
                + bb * (Tc + Tr) * D * 4        # f32 normalized temporaries
                + bb * Tc * Tr * 4              # (BB, Tc, Tr) f32 similarity block
                + 2 * bb * 128 * 4)             # double-buffered output slab
    bb = 8
    while bb < 128 and need(bb + 8) <= 0.8 * budget:
        bb += 8
    if B > 8:
        # Guarantee >= 2 grid steps so both v7x TensorCores get work.
        bb = min(bb, _round_up(pl.cdiv(B, 2), 8))
    bb = min(bb, _round_up(B, 8))               # never larger than the batch
    return max(8, bb)


def _bertscore_kernel(lens_ref, c_ref, r_ref, out_ref):
    lens = lens_ref[...]                        # (BB, 2) int32: [:,0]=hyp, [:,1]=ref
    bb = lens.shape[0]
    tc = c_ref.shape[1]
    tr = r_ref.shape[1]

    hyp_len = lens[:, 0:1]                      # (BB, 1)
    ref_len = lens[:, 1:2]                      # (BB, 1)
    cm = (lax.broadcasted_iota(jnp.int32, (bb, tc), 1) < hyp_len).astype(jnp.float32)
    rm = (lax.broadcasted_iota(jnp.int32, (bb, tr), 1) < ref_len).astype(jnp.float32)

    # Mask folded into the normalization: padded tokens (and garbage rows of a
    # partial last block) become exact zero vectors, so sim is exactly 0 there
    # (bert_score's zero-mask convention) with no (BB,Tc,Tr) mask pass.
    # jnp.where (not multiply) so NaN/Inf overhang garbage cannot propagate.
    cf = jnp.where(cm[:, :, None] > 0.0, c_ref[...].astype(jnp.float32), 0.0)
    rf = jnp.where(rm[:, :, None] > 0.0, r_ref[...].astype(jnp.float32), 0.0)
    cn = (cf * lax.rsqrt(jnp.sum(cf * cf, axis=-1, keepdims=True) + EPS)
          ).astype(jnp.bfloat16)
    rn = (rf * lax.rsqrt(jnp.sum(rf * rf, axis=-1, keepdims=True) + EPS)
          ).astype(jnp.bfloat16)

    # Batched (BB, Tc, Tr) cosine similarity: bf16 MXU operands, f32 accumulate.
    sim = jnp.einsum("bcd,brd->bcr", cn, rn, preferred_element_type=jnp.float32)

    # idf=False -> uniform weights over valid tokens; defer the divide to the
    # (BB,1) row sums and push it to the EUP with approx reciprocal.
    n_c = jnp.sum(cm, axis=1, keepdims=True)                      # (BB, 1)
    n_r = jnp.sum(rm, axis=1, keepdims=True)                      # (BB, 1)
    p = (jnp.sum(jnp.max(sim, axis=2) * cm, axis=1, keepdims=True)
         * pl.reciprocal(n_c + EPS, approx=True))                 # precision
    rcl = (jnp.sum(jnp.max(sim, axis=1) * rm, axis=1, keepdims=True)
           * pl.reciprocal(n_r + EPS, approx=True))               # recall
    f = 2.0 * p * rcl * pl.reciprocal(p + rcl + EPS, approx=True)

    # rescale_with_baseline=True
    p_s = (p - BASE_P) / (1.0 - BASE_P)
    r_s = (rcl - BASE_R) / (1.0 - BASE_R)
    f_s = (f - BASE_F) / (1.0 - BASE_F)

    # One lane-dense (BB, 128) output slab: lane0=P lane1=R lane2=F.
    lane = lax.broadcasted_iota(jnp.int32, (bb, 128), 1)
    out = jnp.where(lane == 0, p_s,
          jnp.where(lane == 1, r_s,
          jnp.where(lane == 2, f_s, 0.0)))
    out_ref[...] = out.astype(out_ref.dtype)


def bertscore_pallas(cand_emb, ref_emb, hyp_len, ref_len, *, block_b=None):
    """cand_emb: [B,Tc,D], ref_emb: [B,Tr,D], hyp_len/ref_len: [B] int lengths.

    Returns rescaled (P, R, F), each shape [B] f32.
    """
    B, Tc, D = cand_emb.shape
    _, Tr, _ = ref_emb.shape

    # bf16 over the wire; all accumulation in-kernel is f32.
    c = cand_emb.astype(jnp.bfloat16)
    r = ref_emb.astype(jnp.bfloat16)

    budget = _vmem_budget_bytes()
    if block_b is None:
        block_b = _pick_block_b(B, Tc, Tr, D, budget)
    block_b = max(8, _round_up(block_b, 8))
    nb = pl.cdiv(B, block_b)
    B_pad = nb * block_b

    # Only the tiny lengths array is padded; padded rows get length 0, and the
    # embeddings are left unpadded (partial last block handled in-kernel).
    lens = jnp.stack([hyp_len.astype(jnp.int32), ref_len.astype(jnp.int32)], axis=1)
    lens = jnp.pad(lens, ((0, B_pad - B), (0, 0)))

    out = pl.pallas_call(
        _bertscore_kernel,
        out_shape=jax.ShapeDtypeStruct((B_pad, 128), jnp.float32),
        grid_spec=pltpu.PrefetchScalarGridSpec(
            num_scalar_prefetch=0,
            grid=(nb,),
            in_specs=[
                pl.BlockSpec((block_b, 2), lambda b: (b, 0)),
                pl.BlockSpec((block_b, Tc, D), lambda b: (b, 0, 0)),
                pl.BlockSpec((block_b, Tr, D), lambda b: (b, 0, 0)),
            ],
            out_specs=pl.BlockSpec((block_b, 128), lambda b: (b, 0)),
        ),
        compiler_params=pltpu.CompilerParams(
            dimension_semantics=("parallel",),
            vmem_limit_bytes=int(budget),
        ),
    )(lens, c, r)

    return out[:B, 0], out[:B, 1], out[:B, 2]


def _bertscore_ref(cand_emb, ref_emb, hyp_len, ref_len):
    """Pure-JAX f32 reference for correctness check (same math as the kernel)."""
    B, Tc, _ = cand_emb.shape
    _, Tr, _ = ref_emb.shape
    cand_mask = (jnp.arange(Tc)[None, :] < hyp_len[:, None]).astype(jnp.float32)
    ref_mask = (jnp.arange(Tr)[None, :] < ref_len[:, None]).astype(jnp.float32)

    def norm(x):
        return x * lax.rsqrt(jnp.sum(x * x, axis=-1, keepdims=True) + EPS)

    c, r = norm(cand_emb.astype(jnp.float32)), norm(ref_emb.astype(jnp.float32))
    sim = jnp.einsum("bcd,brd->bcr", c, r)
    sim = sim * (cand_mask[:, :, None] * ref_mask[:, None, :])
    w_c = cand_mask / (jnp.sum(cand_mask, -1, keepdims=True) + EPS)
    w_r = ref_mask / (jnp.sum(ref_mask, -1, keepdims=True) + EPS)
    p = jnp.sum(jnp.max(sim, axis=2) * w_c, axis=-1)
    rcl = jnp.sum(jnp.max(sim, axis=1) * w_r, axis=-1)
    f = 2.0 * p * rcl / (p + rcl + EPS)
    return ((p - BASE_P) / (1 - BASE_P),
            (rcl - BASE_R) / (1 - BASE_R),
            (f - BASE_F) / (1 - BASE_F))


if __name__ == "__main__":
    # TODO(synk): DistilBERT tokenizer + 5-layer contextual encoder (loaded from
    # a checkpoint in the original module) has no in-script equivalent; a
    # deterministic synthetic embedding table stands in for it.
    B, Tc, Tr, D, V = 2, 8, 8, 32, 64
    key = jax.random.PRNGKey(0)
    k_tab, k_hyp, k_ref = jax.random.split(key, 3)

    emb_table = jax.random.normal(k_tab, (V, D), jnp.float32) * 0.1  # synthetic params
    hyp_ids = jax.random.randint(k_hyp, (B, Tc), 0, V)
    ref_ids = jax.random.randint(k_ref, (B, Tr), 0, V)

    hyp_len = jnp.array([8, 5], jnp.int32)
    ref_len = jnp.array([6, 8], jnp.int32)

    # Plain-JAX "encoder" glue: deterministic embedding lookup.
    cand_emb = emb_table[hyp_ids]   # [B, Tc, D]
    ref_emb = emb_table[ref_ids]    # [B, Tr, D]

    p, r, f = bertscore_pallas(cand_emb, ref_emb, hyp_len, ref_len)
    jax.block_until_ready((p, r, f))

    # Reference sees the same bf16-quantized embeddings the kernel consumes, so
    # the check isolates kernel numerics (bf16 MXU + approx reciprocal), which
    # the (x - 0.8)/0.2 baseline rescale amplifies ~5x.
    cand_q = cand_emb.astype(jnp.bfloat16).astype(jnp.float32)
    ref_q = ref_emb.astype(jnp.bfloat16).astype(jnp.float32)
    p_ref_, r_ref_, f_ref_ = _bertscore_ref(cand_q, ref_q, hyp_len, ref_len)
    assert jnp.allclose(p, p_ref_, atol=5e-2), (p, p_ref_)
    assert jnp.allclose(r, r_ref_, atol=5e-2), (r, r_ref_)
    assert jnp.allclose(f, f_ref_, atol=5e-2), (f, f_ref_)

    print("KERNEL_OK")
</pallas_src>

<mosaic_0001>
module attributes {stable_mosaic.version = 11 : i64} {
  func.func @_bertscore_kernel(%arg0: i32, %arg1: memref<8x2xi32, #tpu.memory_space<vmem>>, %arg2: memref<8x8x32xbf16, #tpu.memory_space<vmem>>, %arg3: memref<8x8x32xbf16, #tpu.memory_space<vmem>>, %arg4: memref<8x128xf32, #tpu.memory_space<vmem>>) attributes {dimension_semantics = [#tpu.dimension_semantics<parallel>], iteration_bounds = array<i64: 1>, scalar_prefetch = 0 : i64, scratch_operands = 0 : i64, tpu.core_type = #tpu.core_type<tc>, window_params = [{transform_indices = @transform_0, window_bounds = array<i64: 8, 2>}, {transform_indices = @transform_1, window_bounds = array<i64: 8, 8, 32>}, {transform_indices = @transform_2, window_bounds = array<i64: 8, 8, 32>}, {transform_indices = @transform_3, window_bounds = array<i64: 8, 128>}]} {
    %c0 = arith.constant 0 : index
    %c0_0 = arith.constant 0 : index
    %0 = vector.load %arg1[%c0, %c0_0] : memref<8x2xi32, #tpu.memory_space<vmem>>, vector<8x2xi32>
    %1 = vector.extract_strided_slice %0 {offsets = [0, 0], sizes = [8, 1], strides = [1, 1]} : vector<8x2xi32> to vector<8x1xi32>
    %2 = vector.extract_strided_slice %0 {offsets = [0, 1], sizes = [8, 1], strides = [1, 1]} : vector<8x2xi32> to vector<8x1xi32>
    %3 = tpu.iota {dimensions = array<i32: 1>} : vector<8x8xi32>
    %4 = vector.broadcast %1 : vector<8x1xi32> to vector<8x8xi32>
    %5 = arith.cmpi slt, %3, %4 : vector<8x8xi32>
    %6 = arith.extui %5 : vector<8x8xi1> to vector<8x8xi32>
    %7 = arith.sitofp %6 : vector<8x8xi32> to vector<8x8xf32>
    %8 = tpu.iota {dimensions = array<i32: 1>} : vector<8x8xi32>
    %9 = vector.broadcast %2 : vector<8x1xi32> to vector<8x8xi32>
    %10 = arith.cmpi slt, %8, %9 : vector<8x8xi32>
    %11 = arith.extui %10 : vector<8x8xi1> to vector<8x8xi32>
    %12 = arith.sitofp %11 : vector<8x8xi32> to vector<8x8xf32>
    %13 = vector.shape_cast %7 : vector<8x8xf32> to vector<8x8x1xf32>
    %cst = arith.constant 0.000000e+00 : f32
    %14 = vector.broadcast %cst : f32 to vector<8x8x1xf32>
    %15 = arith.cmpf ogt, %13, %14 : vector<8x8x1xf32>
    %c0_1 = arith.constant 0 : index
    %c0_2 = arith.constant 0 : index
    %c0_3 = arith.constant 0 : index
    %16 = vector.load %arg2[%c0_1, %c0_2, %c0_3] : memref<8x8x32xbf16, #tpu.memory_space<vmem>>, vector<8x8x32xbf16>
    %17 = arith.extf %16 : vector<8x8x32xbf16> to vector<8x8x32xf32>
    %cst_4 = arith.constant 0.000000e+00 : f32
    %18 = vector.shape_cast %15 : vector<8x8x1xi1> to vector<8x8x1xi1>
    %19 = vector.broadcast %18 : vector<8x8x1xi1> to vector<8x8x32xi1>
    %20 = vector.broadcast %cst_4 : f32 to vector<8x8x32xf32>
    %21 = arith.select %19, %17, %20 : vector<8x8x32xi1>, vector<8x8x32xf32>
    %22 = vector.shape_cast %12 : vector<8x8xf32> to vector<8x8x1xf32>
    %cst_5 = arith.constant 0.000000e+00 : f32
    %23 = vector.broadcast %cst_5 : f32 to vector<8x8x1xf32>
    %24 = arith.cmpf ogt, %22, %23 : vector<8x8x1xf32>
    %c0_6 = arith.constant 0 : index
    %c0_7 = arith.constant 0 : index
    %c0_8 = arith.constant 0 : index
    %25 = vector.load %arg3[%c0_6, %c0_7, %c0_8] : memref<8x8x32xbf16, #tpu.memory_space<vmem>>, vector<8x8x32xbf16>
    %26 = arith.extf %25 : vector<8x8x32xbf16> to vector<8x8x32xf32>
    %cst_9 = arith.constant 0.000000e+00 : f32
    %27 = vector.shape_cast %24 : vector<8x8x1xi1> to vector<8x8x1xi1>
    %28 = vector.broadcast %27 : vector<8x8x1xi1> to vector<8x8x32xi1>
    %29 = vector.broadcast %cst_9 : f32 to vector<8x8x32xf32>
    %30 = arith.select %28, %26, %29 : vector<8x8x32xi1>, vector<8x8x32xf32>
    %31 = arith.mulf %21, %21 : vector<8x8x32xf32>
    %cst_10 = arith.constant dense<0.000000e+00> : vector<8x8xf32>
    %32 = vector.multi_reduction <add>, %31, %cst_10 [2] : vector<8x8x32xf32> to vector<8x8xf32>
    %33 = vector.shape_cast %32 : vector<8x8xf32> to vector<8x8x1xf32>
    %cst_11 = arith.constant 9.99999993E-9 : f32
    %34 = vector.broadcast %cst_11 : f32 to vector<8x8x1xf32>
    %35 = arith.addf %33, %34 : vector<8x8x1xf32>
    %36 = math.rsqrt %35 : vector<8x8x1xf32>
    %37 = vector.broadcast %36 : vector<8x8x1xf32> to vector<8x8x32xf32>
    %38 = arith.mulf %21, %37 : vector<8x8x32xf32>
    %39 = arith.truncf %38 : vector<8x8x32xf32> to vector<8x8x32xbf16>
    %40 = arith.mulf %30, %30 : vector<8x8x32xf32>
    %cst_12 = arith.constant dense<0.000000e+00> : vector<8x8xf32>
    %41 = vector.multi_reduction <add>, %40, %cst_12 [2] : vector<8x8x32xf32> to vector<8x8xf32>
    %42 = vector.shape_cast %41 : vector<8x8xf32> to vector<8x8x1xf32>
    %cst_13 = arith.constant 9.99999993E-9 : f32
    %43 = vector.broadcast %cst_13 : f32 to vector<8x8x1xf32>
    %44 = arith.addf %42, %43 : vector<8x8x1xf32>
    %45 = math.rsqrt %44 : vector<8x8x1xf32>
    %46 = vector.broadcast %45 : vector<8x8x1xf32> to vector<8x8x32xf32>
    %47 = arith.mulf %30, %46 : vector<8x8x32xf32>
    %48 = arith.truncf %47 : vector<8x8x32xf32> to vector<8x8x32xbf16>
    "tpu.trace_start"() <{level = 10 : i32, message = "bcd,brd->bcr"}> : () -> ()
    %cst_14 = arith.constant dense<0.000000e+00> : vector<8x8x8xf32>
    %49 = tpu.matmul %39, %48, %cst_14 {dimension_numbers = #tpu.dot_dimension_numbers<[2], [2], [1], [1], [0, 0, 0, 1, 1, 1], [0], [0]>} : vector<8x8x32xbf16>, vector<8x8x32xbf16>, vector<8x8x8xf32> -> vector<8x8x8xf32>
    "tpu.trace_stop"() : () -> ()
    %cst_15 = arith.constant dense<0.000000e+00> : vector<8xf32>
    %50 = vector.multi_reduction <add>, %7, %cst_15 [1] : vector<8x8xf32> to vector<8xf32>
    %51 = vector.shape_cast %50 : vector<8xf32> to vector<8x1xf32>
    %cst_16 = arith.constant dense<0.000000e+00> : vector<8xf32>
    %52 = vector.multi_reduction <add>, %12, %cst_16 [1] : vector<8x8xf32> to vector<8xf32>
    %53 = vector.shape_cast %52 : vector<8xf32> to vector<8x1xf32>
    %cst_17 = arith.constant dense<0xFF800000> : vector<8x8xf32>
    %54 = vector.multi_reduction <maximumf>, %49, %cst_17 [2] : vector<8x8x8xf32> to vector<8x8xf32>
    %55 = arith.mulf %54, %7 : vector<8x8xf32>
    %cst_18 = arith.constant dense<0.000000e+00> : vector<8xf32>
    %56 = vector.multi_reduction <add>, %55, %cst_18 [1] : vector<8x8xf32> to vector<8xf32>
    %57 = vector.shape_cast %56 : vector<8xf32> to vector<8x1xf32>
    %cst_19 = arith.constant 9.99999993E-9 : f32
    %58 = vector.broadcast %cst_19 : f32 to vector<8x1xf32>
    %59 = arith.addf %51, %58 : vector<8x1xf32>
    %60 = tpu.reciprocal %59 {approx = true} : vector<8x1xf32> -> vector<8x1xf32>
    %61 = arith.mulf %57, %60 : vector<8x1xf32>
    %cst_20 = arith.constant dense<0xFF800000> : vector<8x8xf32>
    %62 = vector.multi_reduction <maximumf>, %49, %cst_20 [1] : vector<8x8x8xf32> to vector<8x8xf32>
    %63 = arith.mulf %62, %12 : vector<8x8xf32>
    %cst_21 = arith.constant dense<0.000000e+00> : vector<8xf32>
    %64 = vector.multi_reduction <add>, %63, %cst_21 [1] : vector<8x8xf32> to vector<8xf32>
    %65 = vector.shape_cast %64 : vector<8xf32> to vector<8x1xf32>
    %cst_22 = arith.constant 9.99999993E-9 : f32
    %66 = vector.broadcast %cst_22 : f32 to vector<8x1xf32>
    %67 = arith.addf %53, %66 : vector<8x1xf32>
    %68 = tpu.reciprocal %67 {approx = true} : vector<8x1xf32> -> vector<8x1xf32>
    %69 = arith.mulf %65, %68 : vector<8x1xf32>
    %cst_23 = arith.constant 2.000000e+00 : f32
    %70 = vector.broadcast %cst_23 : f32 to vector<8x1xf32>
    %71 = arith.mulf %70, %61 : vector<8x1xf32>
    %72 = arith.mulf %71, %69 : vector<8x1xf32>
    %73 = arith.addf %61, %69 : vector<8x1xf32>
    %cst_24 = arith.constant 9.99999993E-9 : f32
    %74 = vector.broadcast %cst_24 : f32 to vector<8x1xf32>
    %75 = arith.addf %73, %74 : vector<8x1xf32>
    %76 = tpu.reciprocal %75 {approx = true} : vector<8x1xf32> -> vector<8x1xf32>
    %77 = arith.mulf %72, %76 : vector<8x1xf32>
    %cst_25 = arith.constant 8.000000e-01 : f32
    %78 = vector.broadcast %cst_25 : f32 to vector<8x1xf32>
    %79 = arith.subf %61, %78 : vector<8x1xf32>
    %cst_26 = arith.constant 2.000000e-01 : f32
    %80 = vector.broadcast %cst_26 : f32 to vector<8x1xf32>
    %81 = arith.divf %79, %80 : vector<8x1xf32>
    %cst_27 = arith.constant 8.000000e-01 : f32
    %82 = vector.broadcast %cst_27 : f32 to vector<8x1xf32>
    %83 = arith.subf %69, %82 : vector<8x1xf32>
    %cst_28 = arith.constant 2.000000e-01 : f32
    %84 = vector.broadcast %cst_28 : f32 to vector<8x1xf32>
    %85 = arith.divf %83, %84 : vector<8x1xf32>
    %cst_29 = arith.constant 8.000000e-01 : f32
    %86 = vector.broadcast %cst_29 : f32 to vector<8x1xf32>
    %87 = arith.subf %77, %86 : vector<8x1xf32>
    %cst_30 = arith.constant 2.000000e-01 : f32
    %88 = vector.broadcast %cst_30 : f32 to vector<8x1xf32>
    %89 = arith.divf %87, %88 : vector<8x1xf32>
    %90 = tpu.iota {dimensions = array<i32: 1>} : vector<8x128xi32>
    %c0_i32 = arith.constant 0 : i32
    %91 = vector.broadcast %c0_i32 : i32 to vector<8x128xi32>
    %92 = arith.cmpi eq, %90, %91 : vector<8x128xi32>
    %c1_i32 = arith.constant 1 : i32
    %93 = vector.broadcast %c1_i32 : i32 to vector<8x128xi32>
    %94 = arith.cmpi eq, %90, %93 : vector<8x128xi32>
    %c2_i32 = arith.constant 2 : i32
    %95 = vector.broadcast %c2_i32 : i32 to vector<8x128xi32>
    %96 = arith.cmpi eq, %90, %95 : vector<8x128xi32>
    %cst_31 = arith.constant 0.000000e+00 : f32
    %97 = vector.shape_cast %89 : vector<8x1xf32> to vector<8x1xf32>
    %98 = vector.broadcast %97 : vector<8x1xf32> to vector<8x128xf32>
    %99 = vector.broadcast %cst_31 : f32 to vector<8x128xf32>
    %100 = arith.select %96, %98, %99 : vector<8x128xi1>, vector<8x128xf32>
    %101 = vector.shape_cast %85 : vector<8x1xf32> to vector<8x1xf32>
    %102 = vector.broadcast %101 : vector<8x1xf32> to vector<8x128xf32>
    %103 = arith.select %94, %102, %100 : vector<8x128xi1>, vector<8x128xf32>
    %104 = vector.shape_cast %81 : vector<8x1xf32> to vector<8x1xf32>
    %105 = vector.broadcast %104 : vector<8x1xf32> to vector<8x128xf32>
    %106 = arith.select %92, %105, %103 : vector<8x128xi1>, vector<8x128xf32>
    %c0_32 = arith.constant 0 : index
    %c0_33 = arith.constant 0 : index
    %107 = vector.load %arg4[%c0_32, %c0_33] : memref<8x128xf32, #tpu.memory_space<vmem>>, vector<8x128xf32>
    tpu.vector_store %arg4[%c0_32, %c0_33], %106 {strides = array<i32>} : memref<8x128xf32, #tpu.memory_space<vmem>>, vector<8x128xf32>,
    return
  }
  func.func @transform_0(%arg0: i32) -> (i32, i32) {
    %c0_i32 = arith.constant 0 : i32
    %c0_i32_0 = arith.constant 0 : i32
    return %arg0, %c0_i32 : i32, i32
  }
  func.func @transform_1(%arg0: i32) -> (i32, i32, i32) {
    %c0_i32 = arith.constant 0 : i32
    %c0_i32_0 = arith.constant 0 : i32
    %c0_i32_1 = arith.constant 0 : i32
    return %arg0, %c0_i32, %c0_i32_0 : i32, i32, i32
  }
  func.func @transform_2(%arg0: i32) -> (i32, i32, i32) {
    %c0_i32 = arith.constant 0 : i32
    %c0_i32_0 = arith.constant 0 : i32
    %c0_i32_1 = arith.constant 0 : i32
    return %arg0, %c0_i32, %c0_i32_0 : i32, i32, i32
  }
  func.func @transform_3(%arg0: i32) -> (i32, i32) {
    %c0_i32 = arith.constant 0 : i32
    %c0_i32_0 = arith.constant 0 : i32
    return %arg0, %c0_i32 : i32, i32
  }
}

</mosaic_0001>

<llo_original>
// kernel: tpu_custom_call.1
$region0: #{tpu_custom_call.1}
  #allocation0 [shape = 'u32[]', space=smem, size = 0x4, offset = 0x4, fixed_abs, tag = 'smem constant byte address 0x4 - core index']
  #allocation1 [shape = 'u32[144,128]{1,0:T(1,128)}', space=vmem, size = 0x12000, scoped, tag = 'internal scratch']
  %s0 = inlined_call_operand.vmem [shape: s32[8,2], index: 0, kind: input, shape index: {}]
  %s1 = inlined_call_operand.vmem [shape: bf16[2,8,32], index: 1, kind: input, shape index: {}]
  %s2 = inlined_call_operand.vmem [shape: bf16[2,8,32], index: 2, kind: input, shape index: {}]
  %s3 = inlined_call_operand.hbm [shape: f32[8,128], index: 3, kind: output, shape index: {}]
  %s4 = sld [smem:[#allocation0]]
  $region22: #{tpu_custom_call.1} parent=0
    _
  %s6 = ssub.s32 1, %s4
  %s7 = scalar_select 0, %s6, %s4
  $region1: #{tpu_custom_call.1} parent=0
    #allocation2 [shape = 'u8[4096]{0}', space=vmem, size = 0x1000, scoped, tag = 'output window, operand 0, single buffered']
    #allocation3 [shape = 's32[1]{0}', space=sflag, size = 0x4, scoped, tag = 'scoped memory for tpu_custom_call.1']
    %8 = vsyncpa [#allocation3], 0
    // Predicated region
    $region2: #{tpu_custom_call.1} parent=1 // pred_check
      _
    $region3: #{tpu_custom_call.1} parent=1 // pred_check_branch
      %10 = sbr.rel (0) target = $region5
    $region4: #{tpu_custom_call.1} parent=1 // pred_region
      _
    $region5: #{tpu_custom_call.1} parent=1 // pred_fallthru
      _
    // Predicated region
    $region6: #{tpu_custom_call.1} parent=1 // pred_check
      _
    $region7: #{tpu_custom_call.1} parent=1 // pred_check_branch
      %12 = sbr.rel (0) target = $region9
    $region8: #{tpu_custom_call.1} parent=1 // pred_region
      _
    $region9: #{tpu_custom_call.1} parent=1 // pred_fallthru
      _
    // Predicated region
    $region10: #{tpu_custom_call.1} parent=1 // pred_check
      _
    $region11: #{tpu_custom_call.1} parent=1 // pred_check_branch
      %14 = sbr.rel (0) target = $region13
    $region12: #{tpu_custom_call.1} parent=1 // pred_region
      _
    $region13: #{tpu_custom_call.1} parent=1 // pred_fallthru
      _
    %v16 = vld [vmem:[%s0] sm:$0xff]
    %v17 = vlaneseq
    %v18 = vand.u32 %v17, 127
    %19 = vset.pattern.permute.xlu0 0
    %20 = vperm.xlu0 %19, %v16
    %v21 = vpop.permute.xlu0 %20
    %vm22 = vcmp.lt.s32.totalorder %v18, %v21
    %v23 = vsel %vm22, 1, 0
    %v24 = vcvt.s32.f32 %v23
    %25 = vset.pattern.permute.xlu0 1
    %26 = vperm.xlu0 %25, %v16
    %v27 = vpop.permute.xlu0 %26
    %vm28 = vcmp.lt.s32.totalorder %v18, %v27
    %v29 = vsel %vm28, 1, 0
    %v30 = vcvt.s32.f32 %v29
    %v31 = vlaneseq
    %v32 = vshrl.u32 %v31, 7
    %v33 = vsub.s32 0, %v32
    %v34 = vrot.slane %v24, %v33
    %36 = vbcast.lane.b32.xlu0 %v34, 256
    %v37 = vpop.permute.xlu0 %36
    %v38 = vlaneseq
    %v39 = vshrl.u32 %v38, 7
    %v40 = vsub.s32 1, %v39
    %v41 = vrot.slane %v24, %v40
    %43 = vbcast.lane.b32.xlu0 %v41, 256
    %v44 = vpop.permute.xlu0 %43
    %v45 = vlaneseq
    %v46 = vshrl.u32 %v45, 7
    %v47 = vsub.s32 2, %v46
    %v48 = vrot.slane %v24, %v47
    %50 = vbcast.lane.b32.xlu0 %v48, 256
    %v51 = vpop.permute.xlu0 %50
    %v52 = vlaneseq
    %v53 = vshrl.u32 %v52, 7
    %v54 = vsub.s32 3, %v53
    %v55 = vrot.slane %v24, %v54
    %57 = vbcast.lane.b32.xlu0 %v55, 256
    %v58 = vpop.permute.xlu0 %57
    %v59 = vlaneseq
    %v60 = vshrl.u32 %v59, 7
    %v61 = vsub.s32 4, %v60
    %v62 = vrot.slane %v24, %v61
    %64 = vbcast.lane.b32.xlu0 %v62, 256
    %v65 = vpop.permute.xlu0 %64
    %v66 = vlaneseq
    %v67 = vshrl.u32 %v66, 7
    %v68 = vsub.s32 5, %v67
    %v69 = vrot.slane %v24, %v68
    %71 = vbcast.lane.b32.xlu0 %v69, 256
    %v72 = vpop.permute.xlu0 %71
    %v73 = vlaneseq
    %v74 = vshrl.u32 %v73, 7
    %v75 = vsub.s32 6, %v74
    %v76 = vrot.slane %v24, %v75
    %78 = vbcast.lane.b32.xlu0 %v76, 256
    %v79 = vpop.permute.xlu0 %78
    %v80 = vlaneseq
    %v81 = vshrl.u32 %v80, 7
    %v82 = vsub.s32 7, %v81
    %v83 = vrot.slane %v24, %v82
    %85 = vbcast.lane.b32.xlu0 %v83, 256
    %v86 = vpop.permute.xlu0 %85
    %vm87 = vcmp.gt.f32.partialorder %v37, 0.0
    %vm88 = vcmp.gt.f32.partialorder %v44, 0.0
    %vm89 = vcmp.gt.f32.partialorder %v51, 0.0
    %vm90 = vcmp.gt.f32.partialorder %v58, 0.0
    %vm91 = vcmp.gt.f32.partialorder %v65, 0.0
    %vm92 = vcmp.gt.f32.partialorder %v72, 0.0
    %vm93 = vcmp.gt.f32.partialorder %v79, 0.0
    %vm94 = vcmp.gt.f32.partialorder %v86, 0.0
    %v95 = vld [vmem:[%s1] sm:$0xf]
    %v96 = vld [vmem:[%s1 + $0x4] sm:$0xf]
    %v97 = vld [vmem:[%s1 + $0x8] sm:$0xf]
    %v98 = vld [vmem:[%s1 + $0xc] sm:$0xf]
    %v99 = vld [vmem:[%s1 + $0x10] sm:$0xf]
    %v100 = vld [vmem:[%s1 + $0x14] sm:$0xf]
    %v101 = vld [vmem:[%s1 + $0x18] sm:$0xf]
    %v102 = vld [vmem:[%s1 + $0x1c] sm:$0xf]
    %v103 = vunpack.c.l.bf16 %v95
    %v104 = vunpack.c.l.bf16 %v96
    %v105 = vunpack.c.l.bf16 %v97
    %v106 = vunpack.c.l.bf16 %v98
    %v107 = vunpack.c.l.bf16 %v99
    %v108 = vunpack.c.l.bf16 %v100
    %v109 = vunpack.c.l.bf16 %v101
    %v110 = vunpack.c.l.bf16 %v102
    %v111 = vsel %vm87, 1, 0
    %v112 = vsel %vm88, 1, 0
    %v113 = vsel %vm89, 1, 0
    %v114 = vsel %vm90, 1, 0
    %v115 = vsel %vm91, 1, 0
    %v116 = vsel %vm92, 1, 0
    %v117 = vsel %vm93, 1, 0
    %v118 = vsel %vm94, 1, 0
    %vm119 = vcmp.eq.s32.totalorder %v111, 1
    %vm120 = vcmp.eq.s32.totalorder %v112, 1
    %vm121 = vcmp.eq.s32.totalorder %v113, 1
    %vm122 = vcmp.eq.s32.totalorder %v114, 1
    %vm123 = vcmp.eq.s32.totalorder %v115, 1
    %vm124 = vcmp.eq.s32.totalorder %v116, 1
    %vm125 = vcmp.eq.s32.totalorder %v117, 1
    %vm126 = vcmp.eq.s32.totalorder %v118, 1
    %v127 = vsel %vm119, %v103, 0.0
    %v128 = vsel %vm120, %v104, 0.0
    %v129 = vsel %vm121, %v105, 0.0
    %v130 = vsel %vm122, %v106, 0.0
    %v131 = vsel %vm123, %v107, 0.0
    %v132 = vsel %vm124, %v108, 0.0
    %v133 = vsel %vm125, %v109, 0.0
    %v134 = vsel %vm126, %v110, 0.0
    %v135 = vlaneseq
    %v136 = vshrl.u32 %v135, 7
    %v137 = vsub.s32 0, %v136
    %v138 = vrot.slane %v30, %v137
    %140 = vbcast.lane.b32.xlu0 %v138, 256
    %v141 = vpop.permute.xlu0 %140
    %v142 = vlaneseq
    %v143 = vshrl.u32 %v142, 7
    %v144 = vsub.s32 1, %v143
    %v145 = vrot.slane %v30, %v144
    %147 = vbcast.lane.b32.xlu0 %v145, 256
    %v148 = vpop.permute.xlu0 %147
    %v149 = vlaneseq
    %v150 = vshrl.u32 %v149, 7
    %v151 = vsub.s32 2, %v150
    %v152 = vrot.slane %v30, %v151
    %154 = vbcast.lane.b32.xlu0 %v152, 256
    %v155 = vpop.permute.xlu0 %154
    %v156 = vlaneseq
    %v157 = vshrl.u32 %v156, 7
    %v158 = vsub.s32 3, %v157
    %v159 = vrot.slane %v30, %v158
    %161 = vbcast.lane.b32.xlu0 %v159, 256
    %v162 = vpop.permute.xlu0 %161
    %v163 = vlaneseq
    %v164 = vshrl.u32 %v163, 7
    %v165 = vsub.s32 4, %v164
    %v166 = vrot.slane %v30, %v165
    %168 = vbcast.lane.b32.xlu0 %v166, 256
    %v169 = vpop.permute.xlu0 %168
    %v170 = vlaneseq
    %v171 = vshrl.u32 %v170, 7
    %v172 = vsub.s32 5, %v171
    %v173 = vrot.slane %v30, %v172
    %175 = vbcast.lane.b32.xlu0 %v173, 256
    %v176 = vpop.permute.xlu0 %175
    %v177 = vlaneseq
    %v178 = vshrl.u32 %v177, 7
    %v179 = vsub.s32 6, %v178
    %v180 = vrot.slane %v30, %v179
    %182 = vbcast.lane.b32.xlu0 %v180, 256
    %v183 = vpop.permute.xlu0 %182
    %v184 = vlaneseq
    %v185 = vshrl.u32 %v184, 7
    %v186 = vsub.s32 7, %v185
    %v187 = vrot.slane %v30, %v186
    %189 = vbcast.lane.b32.xlu0 %v187, 256
    %v190 = vpop.permute.xlu0 %189
    %vm191 = vcmp.gt.f32.partialorder %v141, 0.0
    %vm192 = vcmp.gt.f32.partialorder %v148, 0.0
    %vm193 = vcmp.gt.f32.partialorder %v155, 0.0
    %vm194 = vcmp.gt.f32.partialorder %v162, 0.0
    %vm195 = vcmp.gt.f32.partialorder %v169, 0.0
    %vm196 = vcmp.gt.f32.partialorder %v176, 0.0
    %vm197 = vcmp.gt.f32.partialorder %v183, 0.0
    %vm198 = vcmp.gt.f32.partialorder %v190, 0.0
    %v199 = vld [vmem:[%s2] sm:$0xf]
    %v200 = vld [vmem:[%s2 + $0x4] sm:$0xf]
    %v201 = vld [vmem:[%s2 + $0x8] sm:$0xf]
    %v202 = vld [vmem:[%s2 + $0xc] sm:$0xf]
    %v203 = vld [vmem:[%s2 + $0x10] sm:$0xf]
    %v204 = vld [vmem:[%s2 + $0x14] sm:$0xf]
    %v205 = vld [vmem:[%s2 + $0x18] sm:$0xf]
    %v206 = vld [vmem:[%s2 + $0x1c] sm:$0xf]
    %v207 = vunpack.c.l.bf16 %v199
    %v208 = vunpack.c.l.bf16 %v200
    %v209 = vunpack.c.l.bf16 %v201
    %v210 = vunpack.c.l.bf16 %v202
    %v211 = vunpack.c.l.bf16 %v203
    %v212 = vunpack.c.l.bf16 %v204
    %v213 = vunpack.c.l.bf16 %v205
    %v214 = vunpack.c.l.bf16 %v206
    %v215 = vsel %vm191, 1, 0
    %v216 = vsel %vm192, 1, 0
    %v217 = vsel %vm193, 1, 0
    %v218 = vsel %vm194, 1, 0
    %v219 = vsel %vm195, 1, 0
    %v220 = vsel %vm196, 1, 0
    %v221 = vsel %vm197, 1, 0
    %v222 = vsel %vm198, 1, 0
    %vm223 = vcmp.eq.s32.totalorder %v215, 1
    %vm224 = vcmp.eq.s32.totalorder %v216, 1
    %vm225 = vcmp.eq.s32.totalorder %v217, 1
    %vm226 = vcmp.eq.s32.totalorder %v218, 1
    %vm227 = vcmp.eq.s32.totalorder %v219, 1
    %vm228 = vcmp.eq.s32.totalorder %v220, 1
    %vm229 = vcmp.eq.s32.totalorder %v221, 1
    %vm230 = vcmp.eq.s32.totalorder %v222, 1
    %v231 = vsel %vm223, %v207, 0.0
    %v232 = vsel %vm224, %v208, 0.0
    %v233 = vsel %vm225, %v209, 0.0
    %v234 = vsel %vm226, %v210, 0.0
    %v235 = vsel %vm227, %v211, 0.0
    %v236 = vsel %vm228, %v212, 0.0
    %v237 = vsel %vm229, %v213, 0.0
    %v238 = vsel %vm230, %v214, 0.0
    %v239 = vmul.f32 %v127, %v127
    %v240 = vmul.f32 %v128, %v128
    %v241 = vmul.f32 %v129, %v129
    %v242 = vmul.f32 %v130, %v130
    %v243 = vmul.f32 %v131, %v131
    %v244 = vmul.f32 %v132, %v132
    %v245 = vmul.f32 %v133, %v133
    %v246 = vmul.f32 %v134, %v134
    %vm247 = vcmask 261120
    %v248 = vsel %vm247, %v239, 0.0
    %249 = vadd.xlane.f32.xlu0 %v248
    %v250 = vpop.xlane.xlu0 %249
    %v251 = vsel %vm247, %v240, 0.0
    %252 = vadd.xlane.f32.xlu0 %v251
    %v253 = vpop.xlane.xlu0 %252
    %v254 = vsel %vm247, %v241, 0.0
    %255 = vadd.xlane.f32.xlu0 %v254
    %v256 = vpop.xlane.xlu0 %255
    %v257 = vsel %vm247, %v242, 0.0
    %258 = vadd.xlane.f32.xlu0 %v257
    %v259 = vpop.xlane.xlu0 %258
    %v260 = vsel %vm247, %v243, 0.0
    %261 = vadd.xlane.f32.xlu0 %v260
    %v262 = vpop.xlane.xlu0 %261
    %v263 = vsel %vm247, %v244, 0.0
    %264 = vadd.xlane.f32.xlu0 %v263
    %v265 = vpop.xlane.xlu0 %264
    %v266 = vsel %vm247, %v245, 0.0
    %267 = vadd.xlane.f32.xlu0 %v266
    %v268 = vpop.xlane.xlu0 %267
    %v269 = vsel %vm247, %v246, 0.0
    %270 = vadd.xlane.f32.xlu0 %v269
    %v271 = vpop.xlane.xlu0 %270
    %v272 = vadd.f32 %v250, 1e-08
    %v273 = vadd.f32 %v253, 1e-08
    %v274 = vadd.f32 %v256, 1e-08
    %v275 = vadd.f32 %v259, 1e-08
    %v276 = vadd.f32 %v262, 1e-08
    %v277 = vadd.f32 %v265, 1e-08
    %v278 = vadd.f32 %v268, 1e-08
    %v279 = vadd.f32 %v271, 1e-08
    %v280 = vrsqrt.pop %v272
    %v281 = vrsqrt.pop %v273
    %v282 = vrsqrt.pop %v274
    %v283 = vrsqrt.pop %v275
    %v284 = vrsqrt.pop %v276
    %v285 = vrsqrt.pop %v277
    %v286 = vrsqrt.pop %v278
    %v287 = vrsqrt.pop %v279
    %v288 = vmul.f32 %v127, %v280
    %v289 = vmul.f32 %v128, %v281
    %v290 = vmul.f32 %v129, %v282
    %v291 = vmul.f32 %v130, %v283
    %v292 = vmul.f32 %v131, %v284
    %v293 = vmul.f32 %v132, %v285
    %v294 = vmul.f32 %v133, %v286
    %v295 = vmul.f32 %v134, %v287
    %v296 = vpack.c.bf16 %v288, %v288
    %v297 = vpack.c.bf16 %v289, %v289
    %v298 = vpack.c.bf16 %v290, %v290
    %v299 = vpack.c.bf16 %v291, %v291
    %v300 = vpack.c.bf16 %v292, %v292
    %v301 = vpack.c.bf16 %v293, %v293
    %v302 = vpack.c.bf16 %v294, %v294
    %v303 = vpack.c.bf16 %v295, %v295
    %v304 = vmul.f32 %v231, %v231
    %v305 = vmul.f32 %v232, %v232
    %v306 = vmul.f32 %v233, %v233
    %v307 = vmul.f32 %v234, %v234
    %v308 = vmul.f32 %v235, %v235
    %v309 = vmul.f32 %v236, %v236
    %v310 = vmul.f32 %v237, %v237
    %v311 = vmul.f32 %v238, %v238
    %v312 = vsel %vm247, %v304, 0.0
    %313 = vadd.xlane.f32.xlu0 %v312
    %v314 = vpop.xlane.xlu0 %313
    %v315 = vsel %vm247, %v305, 0.0
    %316 = vadd.xlane.f32.xlu0 %v315
    %v317 = vpop.xlane.xlu0 %316
    %v318 = vsel %vm247, %v306, 0.0
    %319 = vadd.xlane.f32.xlu0 %v318
    %v320 = vpop.xlane.xlu0 %319
    %v321 = vsel %vm247, %v307, 0.0
    %322 = vadd.xlane.f32.xlu0 %v321
    %v323 = vpop.xlane.xlu0 %322
    %v324 = vsel %vm247, %v308, 0.0
    %325 = vadd.xlane.f32.xlu0 %v324
    %v326 = vpop.xlane.xlu0 %325
    %v327 = vsel %vm247, %v309, 0.0
    %328 = vadd.xlane.f32.xlu0 %v327
    %v329 = vpop.xlane.xlu0 %328
    %v330 = vsel %vm247, %v310, 0.0
    %331 = vadd.xlane.f32.xlu0 %v330
    %v332 = vpop.xlane.xlu0 %331
    %v333 = vsel %vm247, %v311, 0.0
    %334 = vadd.xlane.f32.xlu0 %v333
    %v335 = vpop.xlane.xlu0 %334
    %v336 = vadd.f32 %v314, 1e-08
    %v337 = vadd.f32 %v317, 1e-08
    %v338 = vadd.f32 %v320, 1e-08
    %v339 = vadd.f32 %v323, 1e-08
    %v340 = vadd.f32 %v326, 1e-08
    %v341 = vadd.f32 %v329, 1e-08
    %v342 = vadd.f32 %v332, 1e-08
    %v343 = vadd.f32 %v335, 1e-08
    %v344 = vrsqrt.pop %v336
    %v345 = vrsqrt.pop %v337
    %v346 = vrsqrt.pop %v338
    %v347 = vrsqrt.pop %v339
    %v348 = vrsqrt.pop %v340
    %v349 = vrsqrt.pop %v341
    %v350 = vrsqrt.pop %v342
    %v351 = vrsqrt.pop %v343
    %v352 = vmul.f32 %v231, %v344
    %v353 = vmul.f32 %v232, %v345
    %v354 = vmul.f32 %v233, %v346
    %v355 = vmul.f32 %v234, %v347
    %v356 = vmul.f32 %v235, %v348
    %v357 = vmul.f32 %v236, %v349
    %v358 = vmul.f32 %v237, %v350
    %v359 = vmul.f32 %v238, %v351
    %v360 = vpack.c.bf16 %v352, %v352
    %v361 = vpack.c.bf16 %v353, %v353
    %v362 = vpack.c.bf16 %v354, %v354
    %v363 = vpack.c.bf16 %v355, %v355
    %v364 = vpack.c.bf16 %v356, %v356
    %v365 = vpack.c.bf16 %v357, %v357
    %v366 = vpack.c.bf16 %v358, %v358
    %v367 = vpack.c.bf16 %v359, %v359
    %v369 = vsel %vm247, %v296, 0
    %v372 = vsel %vm247, %v360, 0
    %374 = vmatprep.subr.bf16.mxu0 0
    %375 = vmatpush1.bf16.xpose.msra.mxu0 %v372
    %376 = vmatprep.subr.bf16.mxu0 0
    %377 = vmatpush1.bf16.xpose.msra.mxu0 0
    %378 = vmatprep.subr.bf16.mxu0 0
    %379 = vmatpush1.bf16.xpose.msra.mxu0 0
    %380 = vmatprep.subr.bf16.mxu0 0
    %381 = vmatpush1.bf16.xpose.msra.mxu0 0
    %382 = vmatprep.subr.bf16.mxu0 0
    %383 = vmatpush1.bf16.xpose.msra.mxu0 0
    %384 = vmatprep.subr.bf16.mxu0 0
    %385 = vmatpush1.bf16.xpose.msra.mxu0 0
    %386 = vmatprep.subr.bf16.mxu0 0
    %387 = vmatpush1.bf16.xpose.msra.mxu0 0
    %388 = vmatprep.subr.bf16.mxu0 0
    %389 = vmatpush1.bf16.xpose.msra.mxu0 0
    %390 = vmatprep.subr.bf16.mxu0 0
    %391 = vmatpush1.bf16.xpose.msra.mxu0 0
    %392 = vmatprep.subr.bf16.mxu0 0
    %393 = vmatpush1.bf16.xpose.msra.mxu0 0
    %394 = vmatprep.subr.bf16.mxu0 0
    %395 = vmatpush1.bf16.xpose.msra.mxu0 0
    %396 = vmatprep.subr.bf16.mxu0 0
    %397 = vmatpush1.bf16.xpose.msra.mxu0 0
    %398 = vmatprep.subr.bf16.mxu0 0
    %399 = vmatpush1.bf16.xpose.msra.mxu0 0
    %400 = vmatprep.subr.bf16.mxu0 0
    %401 = vmatpush1.bf16.xpose.msra.mxu0 0
    %402 = vmatprep.subr.bf16.mxu0 0
    %403 = vmatpush1.bf16.xpose.msra.mxu0 0
    %404 = vmatprep.subr.bf16.mxu0 0
    %405 = vmatpush1.bf16.xpose.msra.mxu0 0
    %406 = vmatprep.mubr.bf16.mxu0 0
    %407 = vmatmul.mubr.bf16.gmra.mrb[0].mxu0 %v369
    %v408 = vpop.f32.mrb[0].mxu0
    %v409 = vadd.f32 0.0, %v408
    %v410 = vpop.f32.mrb[0].mxu0
    %v411 = vpop.f32.mrb[0].mxu0
    %v412 = vpop.f32.mrb[0].mxu0
    %413 = vdwg.mxu0
    %v415 = vsel %vm247, %v297, 0
    %v418 = vsel %vm247, %v361, 0
    %420 = vmatprep.subr.bf16.mxu0 0
    %421 = vmatpush1.bf16.xpose.msra.mxu0 %v418
    %422 = vmatprep.subr.bf16.mxu0 0
    %423 = vmatpush1.bf16.xpose.msra.mxu0 0
    %424 = vmatprep.subr.bf16.mxu0 0
    %425 = vmatpush1.bf16.xpose.msra.mxu0 0
    %426 = vmatprep.subr.bf16.mxu0 0
    %427 = vmatpush1.bf16.xpose.msra.mxu0 0
    %428 = vmatprep.subr.bf16.mxu0 0
    %429 = vmatpush1.bf16.xpose.msra.mxu0 0
    %430 = vmatprep.subr.bf16.mxu0 0
    %431 = vmatpush1.bf16.xpose.msra.mxu0 0
    %432 = vmatprep.subr.bf16.mxu0 0
    %433 = vmatpush1.bf16.xpose.msra.mxu0 0
    %434 = vmatprep.subr.bf16.mxu0 0
    %435 = vmatpush1.bf16.xpose.msra.mxu0 0
    %436 = vmatprep.subr.bf16.mxu0 0
    %437 = vmatpush1.bf16.xpose.msra.mxu0 0
    %438 = vmatprep.subr.bf16.mxu0 0
    %439 = vmatpush1.bf16.xpose.msra.mxu0 0
    %440 = vmatprep.subr.bf16.mxu0 0
    %441 = vmatpush1.bf16.xpose.msra.mxu0 0
    %442 = vmatprep.subr.bf16.mxu0 0
    %443 = vmatpush1.bf16.xpose.msra.mxu0 0
    %444 = vmatprep.subr.bf16.mxu0 0
    %445 = vmatpush1.bf16.xpose.msra.mxu0 0
    %446 = vmatprep.subr.bf16.mxu0 0
    %447 = vmatpush1.bf16.xpose.msra.mxu0 0
    %448 = vmatprep.subr.bf16.mxu0 0
    %449 = vmatpush1.bf16.xpose.msra.mxu0 0
    %450 = vmatprep.subr.bf16.mxu0 0
    %451 = vmatpush1.bf16.xpose.msra.mxu0 0
    %452 = vmatprep.mubr.bf16.mxu0 0
    %453 = vmatmul.mubr.bf16.gmra.mrb[0].mxu0 %v415
    %v454 = vpop.f32.mrb[0].mxu0
    %v455 = vadd.f32 0.0, %v454
    %v456 = vpop.f32.mrb[0].mxu0
    %v457 = vpop.f32.mrb[0].mxu0
    %v458 = vpop.f32.mrb[0].mxu0
    %459 = vdwg.mxu0
    %v461 = vsel %vm247, %v298, 0
    %v464 = vsel %vm247, %v362, 0
    %466 = vmatprep.subr.bf16.mxu0 0
    %467 = vmatpush1.bf16.xpose.msra.mxu0 %v464
    %468 = vmatprep.subr.bf16.mxu0 0
    %469 = vmatpush1.bf16.xpose.msra.mxu0 0
    %470 = vmatprep.subr.bf16.mxu0 0
    %471 = vmatpush1.bf16.xpose.msra.mxu0 0
    %472 = vmatprep.subr.bf16.mxu0 0
    %473 = vmatpush1.bf16.xpose.msra.mxu0 0
    %474 = vmatprep.subr.bf16.mxu0 0
    %475 = vmatpush1.bf16.xpose.msra.mxu0 0
    %476 = vmatprep.subr.bf16.mxu0 0
    %477 = vmatpush1.bf16.xpose.msra.mxu0 0
    %478 = vmatprep.subr.bf16.mxu0 0
    %479 = vmatpush1.bf16.xpose.msra.mxu0 0
    %480 = vmatprep.subr.bf16.mxu0 0
    %481 = vmatpush1.bf16.xpose.msra.mxu0 0
    %482 = vmatprep.subr.bf16.mxu0 0
    %483 = vmatpush1.bf16.xpose.msra.mxu0 0
    %484 = vmatprep.subr.bf16.mxu0 0
    %485 = vmatpush1.bf16.xpose.msra.mxu0 0
    %486 = vmatprep.subr.bf16.mxu0 0
    %487 = vmatpush1.bf16.xpose.msra.mxu0 0
    %488 = vmatprep.subr.bf16.mxu0 0
    %489 = vmatpush1.bf16.xpose.msra.mxu0 0
    %490 = vmatprep.subr.bf16.mxu0 0
    %491 = vmatpush1.bf16.xpose.msra.mxu0 0
    %492 = vmatprep.subr.bf16.mxu0 0
    %493 = vmatpush1.bf16.xpose.msra.mxu0 0
    %494 = vmatprep.subr.bf16.mxu0 0
    %495 = vmatpush1.bf16.xpose.msra.mxu0 0
    %496 = vmatprep.subr.bf16.mxu0 0
    %497 = vmatpush1.bf16.xpose.msra.mxu0 0
    %498 = vmatprep.mubr.bf16.mxu0 0
    %499 = vmatmul.mubr.bf16.gmra.mrb[0].mxu0 %v461
    %v500 = vpop.f32.mrb[0].mxu0
    %v501 = vadd.f32 0.0, %v500
    %v502 = vpop.f32.mrb[0].mxu0
    %v503 = vpop.f32.mrb[0].mxu0
    %v504 = vpop.f32.mrb[0].mxu0
    %505 = vdwg.mxu0
    %v507 = vsel %vm247, %v299, 0
    %v510 = vsel %vm247, %v363, 0
    %512 = vmatprep.subr.bf16.mxu0 0
    %513 = vmatpush1.bf16.xpose.msra.mxu0 %v510
    %514 = vmatprep.subr.bf16.mxu0 0
    %515 = vmatpush1.bf16.xpose.msra.mxu0 0
    %516 = vmatprep.subr.bf16.mxu0 0
    %517 = vmatpush1.bf16.xpose.msra.mxu0 0
    %518 = vmatprep.subr.bf16.mxu0 0
    %519 = vmatpush1.bf16.xpose.msra.mxu0 0
    %520 = vmatprep.subr.bf16.mxu0 0
    %521 = vmatpush1.bf16.xpose.msra.mxu0 0
    %522 = vmatprep.subr.bf16.mxu0 0
    %523 = vmatpush1.bf16.xpose.msra.mxu0 0
    %524 = vmatprep.subr.bf16.mxu0 0
    %525 = vmatpush1.bf16.xpose.msra.mxu0 0
    %526 = vmatprep.subr.bf16.mxu0 0
    %527 = vmatpush1.bf16.xpose.msra.mxu0 0
    %528 = vmatprep.subr.bf16.mxu0 0
    %529 = vmatpush1.bf16.xpose.msra.mxu0 0
    %530 = vmatprep.subr.bf16.mxu0 0
    %531 = vmatpush1.bf16.xpose.msra.mxu0 0
    %532 = vmatprep.subr.bf16.mxu0 0
    %533 = vmatpush1.bf16.xpose.msra.mxu0 0
    %534 = vmatprep.subr.bf16.mxu0 0
    %535 = vmatpush1.bf16.xpose.msra.mxu0 0
    %536 = vmatprep.subr.bf16.mxu0 0
    %537 = vmatpush1.bf16.xpose.msra.mxu0 0
    %538 = vmatprep.subr.bf16.mxu0 0
    %539 = vmatpush1.bf16.xpose.msra.mxu0 0
    %540 = vmatprep.subr.bf16.mxu0 0
    %541 = vmatpush1.bf16.xpose.msra.mxu0 0
    %542 = vmatprep.subr.bf16.mxu0 0
    %543 = vmatpush1.bf16.xpose.msra.mxu0 0
    %544 = vmatprep.mubr.bf16.mxu0 0
    %545 = vmatmul.mubr.bf16.gmra.mrb[0].mxu0 %v507
    %v546 = vpop.f32.mrb[0].mxu0
    %v547 = vadd.f32 0.0, %v546
    %v548 = vpop.f32.mrb[0].mxu0
    %v549 = vpop.f32.mrb[0].mxu0
    %v550 = vpop.f32.mrb[0].mxu0
    %551 = vdwg.mxu0
    %v553 = vsel %vm247, %v300, 0
    %v556 = vsel %vm247, %v364, 0
    %558 = vmatprep.subr.bf16.mxu0 0
    %559 = vmatpush1.bf16.xpose.msra.mxu0 %v556
    %560 = vmatprep.subr.bf16.mxu0 0
    %561 = vmatpush1.bf16.xpose.msra.mxu0 0
    %562 = vmatprep.subr.bf16.mxu0 0
    %563 = vmatpush1.bf16.xpose.msra.mxu0 0
    %564 = vmatprep.subr.bf16.mxu0 0
    %565 = vmatpush1.bf16.xpose.msra.mxu0 0
    %566 = vmatprep.subr.bf16.mxu0 0
    %567 = vmatpush1.bf16.xpose.msra.mxu0 0
    %568 = vmatprep.subr.bf16.mxu0 0
    %569 = vmatpush1.bf16.xpose.msra.mxu0 0
    %570 = vmatprep.subr.bf16.mxu0 0
    %571 = vmatpush1.bf16.xpose.msra.mxu0 0
    %572 = vmatprep.subr.bf16.mxu0 0
    %573 = vmatpush1.bf16.xpose.msra.mxu0 0
    %574 = vmatprep.subr.bf16.mxu0 0
    %575 = vmatpush1.bf16.xpose.msra.mxu0 0
    %576 = vmatprep.subr.bf16.mxu0 0
    %577 = vmatpush1.bf16.xpose.msra.mxu0 0
    %578 = vmatprep.subr.bf16.mxu0 0
    %579 = vmatpush1.bf16.xpose.msra.mxu0 0
    %580 = vmatprep.subr.bf16.mxu0 0
    %581 = vmatpush1.bf16.xpose.msra.mxu0 0
    %582 = vmatprep.subr.bf16.mxu0 0
    %583 = vmatpush1.bf16.xpose.msra.mxu0 0
    %584 = vmatprep.subr.bf16.mxu0 0
    %585 = vmatpush1.bf16.xpose.msra.mxu0 0
    %586 = vmatprep.subr.bf16.mxu0 0
    %587 = vmatpush1.bf16.xpose.msra.mxu0 0
    %588 = vmatprep.subr.bf16.mxu0 0
    %589 = vmatpush1.bf16.xpose.msra.mxu0 0
    %590 = vmatprep.mubr.bf16.mxu0 0
    %591 = vmatmul.mubr.bf16.gmra.mrb[0].mxu0 %v553
    %v592 = vpop.f32.mrb[0].mxu0
    %v593 = vadd.f32 0.0, %v592
    %v594 = vpop.f32.mrb[0].mxu0
    %v595 = vpop.f32.mrb[0].mxu0
    %v596 = vpop.f32.mrb[0].mxu0
    %597 = vdwg.mxu0
    %v599 = vsel %vm247, %v301, 0
    %v602 = vsel %vm247, %v365, 0
    %604 = vmatprep.subr.bf16.mxu0 0
    %605 = vmatpush1.bf16.xpose.msra.mxu0 %v602
    %606 = vmatprep.subr.bf16.mxu0 0
    %607 = vmatpush1.bf16.xpose.msra.mxu0 0
    %608 = vmatprep.subr.bf16.mxu0 0
    %609 = vmatpush1.bf16.xpose.msra.mxu0 0
    %610 = vmatprep.subr.bf16.mxu0 0
    %611 = vmatpush1.bf16.xpose.msra.mxu0 0
    %612 = vmatprep.subr.bf16.mxu0 0
    %613 = vmatpush1.bf16.xpose.msra.mxu0 0
    %614 = vmatprep.subr.bf16.mxu0 0
    %615 = vmatpush1.bf16.xpose.msra.mxu0 0
    %616 = vmatprep.subr.bf16.mxu0 0
    %617 = vmatpush1.bf16.xpose.msra.mxu0 0
    %618 = vmatprep.subr.bf16.mxu0 0
    %619 = vmatpush1.bf16.xpose.msra.mxu0 0
    %620 = vmatprep.subr.bf16.mxu0 0
    %621 = vmatpush1.bf16.xpose.msra.mxu0 0
    %622 = vmatprep.subr.bf16.mxu0 0
    %623 = vmatpush1.bf16.xpose.msra.mxu0 0
    %624 = vmatprep.subr.bf16.mxu0 0
    %625 = vmatpush1.bf16.xpose.msra.mxu0 0
    %626 = vmatprep.subr.bf16.mxu0 0
    %627 = vmatpush1.bf16.xpose.msra.mxu0 0
    %628 = vmatprep.subr.bf16.mxu0 0
    %629 = vmatpush1.bf16.xpose.msra.mxu0 0
    %630 = vmatprep.subr.bf16.mxu0 0
    %631 = vmatpush1.bf16.xpose.msra.mxu0 0
    %632 = vmatprep.subr.bf16.mxu0 0
    %633 = vmatpush1.bf16.xpose.msra.mxu0 0
    %634 = vmatprep.subr.bf16.mxu0 0
    %635 = vmatpush1.bf16.xpose.msra.mxu0 0
    %636 = vmatprep.mubr.bf16.mxu0 0
    %637 = vmatmul.mubr.bf16.gmra.mrb[0].mxu0 %v599
    %v638 = vpop.f32.mrb[0].mxu0
    %v639 = vadd.f32 0.0, %v638
    %v640 = vpop.f32.mrb[0].mxu0
    %v641 = vpop.f32.mrb[0].mxu0
    %v642 = vpop.f32.mrb[0].mxu0
    %643 = vdwg.mxu0
    %v645 = vsel %vm247, %v302, 0
    %v648 = vsel %vm247, %v366, 0
    %650 = vmatprep.subr.bf16.mxu0 0
    %651 = vmatpush1.bf16.xpose.msra.mxu0 %v648
    %652 = vmatprep.subr.bf16.mxu0 0
    %653 = vmatpush1.bf16.xpose.msra.mxu0 0
    %654 = vmatprep.subr.bf16.mxu0 0
    %655 = vmatpush1.bf16.xpose.msra.mxu0 0
    %656 = vmatprep.subr.bf16.mxu0 0
    %657 = vmatpush1.bf16.xpose.msra.mxu0 0
    %658 = vmatprep.subr.bf16.mxu0 0
    %659 = vmatpush1.bf16.xpose.msra.mxu0 0
    %660 = vmatprep.subr.bf16.mxu0 0
    %661 = vmatpush1.bf16.xpose.msra.mxu0 0
    %662 = vmatprep.subr.bf16.mxu0 0
    %663 = vmatpush1.bf16.xpose.msra.mxu0 0
    %664 = vmatprep.subr.bf16.mxu0 0
    %665 = vmatpush1.bf16.xpose.msra.mxu0 0
    %666 = vmatprep.subr.bf16.mxu0 0
    %667 = vmatpush1.bf16.xpose.msra.mxu0 0
    %668 = vmatprep.subr.bf16.mxu0 0
    %669 = vmatpush1.bf16.xpose.msra.mxu0 0
    %670 = vmatprep.subr.bf16.mxu0 0
    %671 = vmatpush1.bf16.xpose.msra.mxu0 0
    %672 = vmatprep.subr.bf16.mxu0 0
    %673 = vmatpush1.bf16.xpose.msra.mxu0 0
    %674 = vmatprep.subr.bf16.mxu0 0
    %675 = vmatpush1.bf16.xpose.msra.mxu0 0
    %676 = vmatprep.subr.bf16.mxu0 0
    %677 = vmatpush1.bf16.xpose.msra.mxu0 0
    %678 = vmatprep.subr.bf16.mxu0 0
    %679 = vmatpush1.bf16.xpose.msra.mxu0 0
    %680 = vmatprep.subr.bf16.mxu0 0
    %681 = vmatpush1.bf16.xpose.msra.mxu0 0
    %682 = vmatprep.mubr.bf16.mxu0 0
    %683 = vmatmul.mubr.bf16.gmra.mrb[0].mxu0 %v645
    %v684 = vpop.f32.mrb[0].mxu0
    %v685 = vadd.f32 0.0, %v684
    %v686 = vpop.f32.mrb[0].mxu0
    %v687 = vpop.f32.mrb[0].mxu0
    %v688 = vpop.f32.mrb[0].mxu0
    %689 = vdwg.mxu0
    %v691 = vsel %vm247, %v303, 0
    %v694 = vsel %vm247, %v367, 0
    %696 = vmatprep.subr.bf16.mxu0 0
    %697 = vmatpush1.bf16.xpose.msra.mxu0 %v694
    %698 = vmatprep.subr.bf16.mxu0 0
    %699 = vmatpush1.bf16.xpose.msra.mxu0 0
    %700 = vmatprep.subr.bf16.mxu0 0
    %701 = vmatpush1.bf16.xpose.msra.mxu0 0
    %702 = vmatprep.subr.bf16.mxu0 0
    %703 = vmatpush1.bf16.xpose.msra.mxu0 0
    %704 = vmatprep.subr.bf16.mxu0 0
    %705 = vmatpush1.bf16.xpose.msra.mxu0 0
    %706 = vmatprep.subr.bf16.mxu0 0
    %707 = vmatpush1.bf16.xpose.msra.mxu0 0
    %708 = vmatprep.subr.bf16.mxu0 0
    %709 = vmatpush1.bf16.xpose.msra.mxu0 0
    %710 = vmatprep.subr.bf16.mxu0 0
    %711 = vmatpush1.bf16.xpose.msra.mxu0 0
    %712 = vmatprep.subr.bf16.mxu0 0
    %713 = vmatpush1.bf16.xpose.msra.mxu0 0
    %714 = vmatprep.subr.bf16.mxu0 0
    %715 = vmatpush1.bf16.xpose.msra.mxu0 0
    %716 = vmatprep.subr.bf16.mxu0 0
    %717 = vmatpush1.bf16.xpose.msra.mxu0 0
    %718 = vmatprep.subr.bf16.mxu0 0
    %719 = vmatpush1.bf16.xpose.msra.mxu0 0
    %720 = vmatprep.subr.bf16.mxu0 0
    %721 = vmatpush1.bf16.xpose.msra.mxu0 0
    %722 = vmatprep.subr.bf16.mxu0 0
    %723 = vmatpush1.bf16.xpose.msra.mxu0 0
    %724 = vmatprep.subr.bf16.mxu0 0
    %725 = vmatpush1.bf16.xpose.msra.mxu0 0
    %726 = vmatprep.subr.bf16.mxu0 0
    %727 = vmatpush1.bf16.xpose.msra.mxu0 0
    %728 = vmatprep.mubr.bf16.mxu0 0
    %729 = vmatmul.mubr.bf16.gmra.mrb[0].mxu0 %v691
    %v730 = vpop.f32.mrb[0].mxu0
    %v731 = vadd.f32 0.0, %v730
    %v732 = vpop.f32.mrb[0].mxu0
    %v733 = vpop.f32.mrb[0].mxu0
    %v734 = vpop.f32.mrb[0].mxu0
    %735 = vdwg.mxu0
    %vm736 = vcmask 64512
    %v737 = vsel %vm736, %v24, 0.0
    %738 = vadd.xlane.f32.xlu0 %v737
    %v739 = vpop.xlane.xlu0 %738
    %v740 = vsel %vm736, %v30, 0.0
    %741 = vadd.xlane.f32.xlu0 %v740
    %v742 = vpop.xlane.xlu0 %741
    %v743 = vsel %vm736, %v409, -inf
    %744 = vmax.xlane.f32.xlu0 %v743
    %v745 = vpop.xlane.xlu0 %744
    %v746 = vsel %vm736, %v455, -inf
    %747 = vmax.xlane.f32.xlu0 %v746
    %v748 = vpop.xlane.xlu0 %747
    %v749 = vsel %vm736, %v501, -inf
    %750 = vmax.xlane.f32.xlu0 %v749
    %v751 = vpop.xlane.xlu0 %750
    %v752 = vsel %vm736, %v547, -inf
    %753 = vmax.xlane.f32.xlu0 %v752
    %v754 = vpop.xlane.xlu0 %753
    %v755 = vsel %vm736, %v593, -inf
    %756 = vmax.xlane.f32.xlu0 %v755
    %v757 = vpop.xlane.xlu0 %756
    %v758 = vsel %vm736, %v639, -inf
    %759 = vmax.xlane.f32.xlu0 %v758
    %v760 = vpop.xlane.xlu0 %759
    %v761 = vsel %vm736, %v685, -inf
    %762 = vmax.xlane.f32.xlu0 %v761
    %v763 = vpop.xlane.xlu0 %762
    %v764 = vsel %vm736, %v731, -inf
    %765 = vmax.xlane.f32.xlu0 %v764
    %v766 = vpop.xlane.xlu0 %765
    %v768 = vlaneseq
    %v769 = vshrl.u32 %v768, 7
    %v770 = vsub.s32 0, %v769
    %v771 = vrot.slane %v24, %v770
    %773 = vbcast.lane.b32.xlu0 %v771, 256
    %v774 = vpop.permute.xlu0 %773
    %v775 = vlaneseq
    %v776 = vshrl.u32 %v775, 7
    %v777 = vsub.s32 1, %v776
    %v778 = vrot.slane %v24, %v777
    %780 = vbcast.lane.b32.xlu0 %v778, 256
    %v781 = vpop.permute.xlu0 %780
    %v782 = vlaneseq
    %v783 = vshrl.u32 %v782, 7
    %v784 = vsub.s32 2, %v783
    %v785 = vrot.slane %v24, %v784
    %787 = vbcast.lane.b32.xlu0 %v785, 256
    %v788 = vpop.permute.xlu0 %787
    %v789 = vlaneseq
    %v790 = vshrl.u32 %v789, 7
    %v791 = vsub.s32 3, %v790
    %v792 = vrot.slane %v24, %v791
    %794 = vbcast.lane.b32.xlu0 %v792, 256
    %v795 = vpop.permute.xlu0 %794
    %v796 = vlaneseq
    %v797 = vshrl.u32 %v796, 7
    %v798 = vsub.s32 4, %v797
    %v799 = vrot.slane %v24, %v798
    %801 = vbcast.lane.b32.xlu0 %v799, 256
    %v802 = vpop.permute.xlu0 %801
    %v803 = vlaneseq
    %v804 = vshrl.u32 %v803, 7
    %v805 = vsub.s32 5, %v804
    %v806 = vrot.slane %v24, %v805
    %808 = vbcast.lane.b32.xlu0 %v806, 256
    %v809 = vpop.permute.xlu0 %808
    %v810 = vlaneseq
    %v811 = vshrl.u32 %v810, 7
    %v812 = vsub.s32 6, %v811
    %v813 = vrot.slane %v24, %v812
    %815 = vbcast.lane.b32.xlu0 %v813, 256
    %v816 = vpop.permute.xlu0 %815
    %v817 = vlaneseq
    %v818 = vshrl.u32 %v817, 7
    %v819 = vsub.s32 7, %v818
    %v820 = vrot.slane %v24, %v819
    %822 = vbcast.lane.b32.xlu0 %v820, 256
    %v823 = vpop.permute.xlu0 %822
    %v832 = vmul.f32 %v745, %v774
    %v833 = vmul.f32 %v748, %v781
    %v834 = vmul.f32 %v751, %v788
    %v835 = vmul.f32 %v754, %v795
    %v836 = vmul.f32 %v757, %v802
    %v837 = vmul.f32 %v760, %v809
    %v838 = vmul.f32 %v763, %v816
    %v839 = vmul.f32 %v766, %v823
    %848 = vset.pattern.permute.xlu0 0
    %849 = vperm.xlu0 %848, %v832
    %v850 = vpop.permute.xlu0 %849
    %851 = vset.pattern.permute.xlu0 0
    %852 = vperm.xlu0 %851, %v833
    %v853 = vpop.permute.xlu0 %852
    %854 = vset.pattern.permute.xlu0 0
    %855 = vperm.xlu0 %854, %v834
    %v856 = vpop.permute.xlu0 %855
    %857 = vset.pattern.permute.xlu0 0
    %858 = vperm.xlu0 %857, %v835
    %v859 = vpop.permute.xlu0 %858
    %860 = vset.pattern.permute.xlu0 0
    %861 = vperm.xlu0 %860, %v836
    %v862 = vpop.permute.xlu0 %861
    %863 = vset.pattern.permute.xlu0 0
    %864 = vperm.xlu0 %863, %v837
    %v865 = vpop.permute.xlu0 %864
    %866 = vset.pattern.permute.xlu0 0
    %867 = vperm.xlu0 %866, %v838
    %v868 = vpop.permute.xlu0 %867
    %869 = vset.pattern.permute.xlu0 0
    %870 = vperm.xlu0 %869, %v839
    %v871 = vpop.permute.xlu0 %870
    %v872 = vlaneseq
    %v873 = vshrl.u32 %v872, 7
    %v874 = vsub.s32 %v18, %v873
    %v875 = vrot.slane %v850, %v874
    %v876 = vlaneseq
    %v877 = vshrl.u32 %v876, 7
    %v878 = vsub.s32 %v18, %v877
    %v879 = vrot.slane %v853, %v878
    %v880 = vlaneseq
    %v881 = vshrl.u32 %v880, 7
    %v882 = vsub.s32 %v18, %v881
    %v883 = vrot.slane %v856, %v882
    %v884 = vlaneseq
    %v885 = vshrl.u32 %v884, 7
    %v886 = vsub.s32 %v18, %v885
    %v887 = vrot.slane %v859, %v886
    %v888 = vlaneseq
    %v889 = vshrl.u32 %v888, 7
    %v890 = vsub.s32 %v18, %v889
    %v891 = vrot.slane %v862, %v890
    %v892 = vlaneseq
    %v893 = vshrl.u32 %v892, 7
    %v894 = vsub.s32 %v18, %v893
    %v895 = vrot.slane %v865, %v894
    %v896 = vlaneseq
    %v897 = vshrl.u32 %v896, 7
    %v898 = vsub.s32 %v18, %v897
    %v899 = vrot.slane %v868, %v898
    %v900 = vlaneseq
    %v901 = vshrl.u32 %v900, 7
    %v902 = vsub.s32 %v18, %v901
    %v903 = vrot.slane %v871, %v902
    %vm904 = vcmask 1041409
    %v905 = vsel %vm904, %v879, %v875
    %vm906 = vcmask 1042434
    %v907 = vsel %vm906, %v883, %v905
    %vm908 = vcmask 1043459
    %v909 = vsel %vm908, %v887, %v907
    %vm910 = vcmask 1044484
    %v911 = vsel %vm910, %v891, %v909
    %vm912 = vcmask 1045509
    %v913 = vsel %vm912, %v895, %v911
    %vm914 = vcmask 1046534
    %v915 = vsel %vm914, %v899, %v913
    %vm916 = vcmask 1047559
    %v917 = vsel %vm916, %v903, %v915
    %v919 = vsel %vm736, %v917, 0.0
    %920 = vadd.xlane.f32.xlu0 %v919
    %v921 = vpop.xlane.xlu0 %920
    %v922 = vadd.f32 %v739, 1e-08
    %v923 = vrcp.pop %v922
    %v924 = vmul.f32 %v921, %v923
    %v925 = vrot.slane %v743, 4
    %v926 = vmax.f32 %v743, %v925
    %v927 = vrot.slane %v926, 2
    %v928 = vmax.f32 %v926, %v927
    %v929 = vrot.slane %v928, 1
    %v930 = vmax.f32 %v928, %v929
    %v931 = vrot.slane %v746, 4
    %v932 = vmax.f32 %v746, %v931
    %v933 = vrot.slane %v932, 2
    %v934 = vmax.f32 %v932, %v933
    %v935 = vrot.slane %v934, 1
    %v936 = vmax.f32 %v934, %v935
    %v937 = vrot.slane %v749, 4
    %v938 = vmax.f32 %v749, %v937
    %v939 = vrot.slane %v938, 2
    %v940 = vmax.f32 %v938, %v939
    %v941 = vrot.slane %v940, 1
    %v942 = vmax.f32 %v940, %v941
    %v943 = vrot.slane %v752, 4
    %v944 = vmax.f32 %v752, %v943
    %v945 = vrot.slane %v944, 2
    %v946 = vmax.f32 %v944, %v945
    %v947 = vrot.slane %v946, 1
    %v948 = vmax.f32 %v946, %v947
    %v949 = vrot.slane %v755, 4
    %v950 = vmax.f32 %v755, %v949
    %v951 = vrot.slane %v950, 2
    %v952 = vmax.f32 %v950, %v951
    %v953 = vrot.slane %v952, 1
    %v954 = vmax.f32 %v952, %v953
    %v955 = vrot.slane %v758, 4
    %v956 = vmax.f32 %v758, %v955
    %v957 = vrot.slane %v956, 2
    %v958 = vmax.f32 %v956, %v957
    %v959 = vrot.slane %v958, 1
    %v960 = vmax.f32 %v958, %v959
    %v961 = vrot.slane %v761, 4
    %v962 = vmax.f32 %v761, %v961
    %v963 = vrot.slane %v962, 2
    %v964 = vmax.f32 %v962, %v963
    %v965 = vrot.slane %v964, 1
    %v966 = vmax.f32 %v964, %v965
    %v967 = vrot.slane %v764, 4
    %v968 = vmax.f32 %v764, %v967
    %v969 = vrot.slane %v968, 2
    %v970 = vmax.f32 %v968, %v969
    %v971 = vrot.slane %v970, 1
    %v972 = vmax.f32 %v970, %v971
    %v974 = vrot.slane %v30, 1
    %v975 = vrot.slane %v30, 2
    %v976 = vrot.slane %v30, 3
    %v977 = vrot.slane %v30, 4
    %v978 = vrot.slane %v30, 5
    %v979 = vrot.slane %v30, 6
    %v980 = vrot.slane %v30, 7
    %v989 = vmul.f32 %v930, %v30
    %v990 = vmul.f32 %v936, %v974
    %v991 = vmul.f32 %v942, %v975
    %v992 = vmul.f32 %v948, %v976
    %v993 = vmul.f32 %v954, %v977
    %v994 = vmul.f32 %v960, %v978
    %v995 = vmul.f32 %v966, %v979
    %v996 = vmul.f32 %v972, %v980
    %v1005 = vrot.slane %v990, 7
    %v1006 = vsel %vm904, %v1005, %v989
    %v1007 = vrot.slane %v991, 6
    %v1008 = vsel %vm906, %v1007, %v1006
    %v1009 = vrot.slane %v992, 5
    %v1010 = vsel %vm908, %v1009, %v1008
    %v1011 = vrot.slane %v993, 4
    %v1012 = vsel %vm910, %v1011, %v1010
    %v1013 = vrot.slane %v994, 3
    %v1014 = vsel %vm912, %v1013, %v1012
    %v1015 = vrot.slane %v995, 2
    %v1016 = vsel %vm914, %v1015, %v1014
    %v1017 = vrot.slane %v996, 1
    %v1018 = vsel %vm916, %v1017, %v1016
    %v1020 = vsel %vm736, %v1018, 0.0
    %1021 = vadd.xlane.f32.xlu0 %v1020
    %v1022 = vpop.xlane.xlu0 %1021
    %v1023 = vadd.f32 %v742, 1e-08
    %v1024 = vrcp.pop %v1023
    %v1025 = vmul.f32 %v1022, %v1024
    %v1026 = vmul.f32 %v924, 2.0
    %v1027 = vmul.f32 %v1026, %v1025
    %v1028 = vadd.f32 %v924, %v1025
    %v1029 = vadd.f32 %v1028, 1e-08
    %v1030 = vrcp.pop %v1029
    %v1031 = vmul.f32 %v1027, %v1030
    %v1032 = vsub.f32 %v924, 0.8
    %v1033 = vrcp.pop 0.2
    %v1034 = vmul.f32 %v1032, %v1033
    %v1035 = vsub.f32 %v1025, 0.8
    %v1036 = vmul.f32 %v1035, %v1033
    %v1037 = vsub.f32 %v1031, 0.8
    %v1038 = vmul.f32 %v1037, %v1033
    %vm1039 = vcmp.eq.s32.totalorder %v18, 0
    %vm1040 = vcmp.eq.s32.totalorder %v18, 1
    %vm1041 = vcmp.eq.s32.totalorder %v18, 2
    %v1042 = vsel %vm1041, %v1038, 0.0
    %v1043 = vsel %vm1040, %v1036, %v1042
    %v1044 = vsel %vm1039, %v1034, %v1043
    %1045 = vst [vmem:[#allocation2] sm:$0xff] %v1044
    // Predicated region
    $region14: #{tpu_custom_call.1} parent=1 // pred_check
      _
    $region15: #{tpu_custom_call.1} parent=1 // pred_check_branch
      %1047 = sbr.rel (0) target = $region17
    $region16: #{tpu_custom_call.1} parent=1 // pred_region
      %s1049 = ssub.s32 128, 128
      %1050 = vsyncadd [#allocation3], %s1049
      %s1052 = sshll.u32 [#allocation2], 4
      %s1053 = int_to_ptr.vmem [resolvable:$true] %s1052
      %1055 = dma.vmem_to_hbm [thread:$0]  %s1053, 128, %s3, [#allocation3]
    $region17: #{tpu_custom_call.1} parent=1 // pred_fallthru
      _
    // Predicated region
    $region18: #{tpu_custom_call.1} parent=1 // pred_check
      _
    $region19: #{tpu_custom_call.1} parent=1 // pred_check_branch
      %1057 = sbr.rel (0) target = $region21
    $region20: #{tpu_custom_call.1} parent=1 // pred_region
      %1058 = dma.done [#allocation3], 128
    $region21: #{tpu_custom_call.1} parent=1 // pred_fallthru
      _
    %1059 = vsyncpa [#allocation3], 1

</llo_original>
